<compile_context>
chip_gen: v5e
topology: v5e:2x2
jax: 0.10.0
libtpu: 0.0.40
codegen_flags: <defaults>
</compile_context>

<pallas_src>
import math
import functools

import jax
import jax.numpy as jnp
from jax.experimental import pallas as pl
from jax.experimental.pallas import tpu as pltpu

# Keep the plain-JAX reference and the in-kernel matmuls at full f32 precision so the
# numeric cross-check below is meaningful.
jax.config.update("jax_default_matmul_precision", "highest")

_VMEM = pl.BlockSpec(memory_space=pltpu.MemorySpace.VMEM)


# ------------------------- diffusion-step MLP (Mish) -------------------------
def _mlp_kernel(e_ref, w1_ref, b1_ref, w2_ref, b2_ref, o_ref):
    h = jnp.dot(e_ref[...], w1_ref[...], preferred_element_type=jnp.float32) + b1_ref[...]
    # Mish: x * tanh(softplus(x)); PyTorch-style threshold at 20 for stability.
    sp = jnp.where(h > 20.0, h, jnp.log(1.0 + jnp.exp(jnp.minimum(h, 20.0))))
    h = h * jnp.tanh(sp)
    o_ref[...] = jnp.dot(h, w2_ref[...], preferred_element_type=jnp.float32) + b2_ref[...]


def diffusion_mlp(emb, w1t, b1, w2t, b2):
    B = emb.shape[0]
    C = w2t.shape[1]
    return pl.pallas_call(
        _mlp_kernel,
        out_shape=jax.ShapeDtypeStruct((B, C), jnp.float32),
        in_specs=[_VMEM] * 5,
        out_specs=_VMEM,
    )(emb, w1t, b1, w2t, b2)


# --------------------- fused WavNet (all residual layers) ---------------------
def _wavnet_kernel(x_in_ref, cond_ref, d_ref,
                   w_in_ref, b_in_ref,
                   w_dp_ref, b_dp_ref,
                   w_cat_ref, b_cat_ref,
                   w_out_ref, b_out_ref,
                   gamma_ref, beta_ref,
                   w_skip_ref, b_skip_ref, w_op_ref, b_op_ref,
                   out_ref,
                   x_s, skip_s,
                   *, cycle, n_layers):
    l = pl.program_id(0)
    B, C, T = x_s.shape

    def mm(a, b):
        return jnp.dot(a, b, preferred_element_type=jnp.float32)

    def conv1x1(w, x, bias=None):
        # 1x1 Conv1d in NCT layout: per-batch (O, K) @ (K, T) matmuls (T lane-dense).
        y = jnp.stack([mm(w, x[i]) for i in range(x.shape[0])], axis=0)
        return y if bias is None else y + bias

    # -------- layer-0 prologue: relu(input_projection(x)); zero the skip accumulator.
    @pl.when(l == 0)
    def _():
        x0 = conv1x1(w_in_ref[...], x_in_ref[...], b_in_ref[...])
        x_s[...] = jnp.maximum(x0, 0.0)
        skip_s[...] = jnp.zeros_like(skip_s)

    x = x_s[...]                                    # (B, C, T), carried across layers
    cond = cond_ref[...]                            # (B, C, T), resident (constant block)

    # diffusion_projection (Linear C->C), broadcast over time
    dproj = mm(d_ref[...], w_dp_ref[0]) + b_dp_ref[0]        # (B, C)
    y = x + dproj[:, :, None]

    # Shifted taps y(t-d) / y(t+d) for dilation d = 2**(l % cycle), zero-padded edges.
    t_iota = jax.lax.broadcasted_iota(jnp.int32, (B, C, T), 2)

    def shift_t(a, off):
        # z[..., t] = a[..., t + off], zero outside [0, T)
        if off == 0:
            return a
        if abs(off) >= T:
            return jnp.zeros_like(a)
        rolled = pltpu.roll(a, (-off) % T, 2)       # XLU lane rotation
        if off > 0:
            return jnp.where(t_iota < T - off, rolled, 0.0)
        return jnp.where(t_iota >= -off, rolled, 0.0)

    didx = l % cycle                                 # dilation index (static set of values)
    y_m = shift_t(y, -1)
    y_p = shift_t(y, +1)
    for j in range(1, cycle):
        dj = 2 ** j
        sel = didx == j
        y_m = jnp.where(sel, shift_t(y, -dj), y_m)
        y_p = jnp.where(sel, shift_t(y, +dj), y_p)

    # Dilated conv (3 taps) + conditioner projection fused into one K=4C matmul.
    cat = jnp.concatenate([y_m, y, y_p, cond], axis=1)        # (B, 4C, T)
    z = conv1x1(w_cat_ref[0], cat, b_cat_ref[0])              # (B, 2C, T)

    # Gated activation: sigmoid(gate) * tanh(filter), chunked along channels.
    gate, filt = z[:, :C, :], z[:, C:, :]
    g = jax.nn.sigmoid(gate) * jnp.tanh(filt)

    # output_projection (1x1) + BatchNorm1d(2C) with one-pass batch statistics.
    # TODO(synk): BatchNorm1d running-stat buffers are not tracked; train-mode batch
    # statistics (mean/var over batch & time) are used, as in a freshly built nn.Module.
    z2 = conv1x1(w_out_ref[0], g, b_out_ref[0])               # (B, 2C, T)
    mean = jnp.mean(z2, axis=(0, 2), keepdims=True)
    msq = jnp.mean(z2 * z2, axis=(0, 2), keepdims=True)
    var = jnp.maximum(msq - mean * mean, 0.0)
    zn = (z2 - mean) * jax.lax.rsqrt(var + 1e-5) * gamma_ref[0] + beta_ref[0]

    resid, skip = zn[:, :C, :], zn[:, C:, :]
    x_s[...] = (x + resid) * (1.0 / math.sqrt(2.0))
    skip_s[...] = skip_s[...] + skip

    # -------- last-layer epilogue: skip head  relu(skip_projection) -> output_projection.
    @pl.when(l == n_layers - 1)
    def _():
        s = skip_s[...] * (1.0 / math.sqrt(n_layers))
        h = conv1x1(w_skip_ref[...], s, b_skip_ref[...])
        h = jnp.maximum(h, 0.0)
        out_ref[...] = conv1x1(w_op_ref[...], h, b_op_ref[...])


def fused_wavnet(x_in, cond, d, p):
    B, _, T = x_in.shape
    C = int(p['C'])
    L = int(p['n_layers'])
    cycle = int(p['cycle'])
    Dout = p['w_op'].shape[0]

    def full_spec(a):
        if a.ndim == 2:
            return pl.BlockSpec(tuple(a.shape), lambda l: (0, 0))
        return pl.BlockSpec(tuple(a.shape), lambda l: (0, 0, 0))

    def layer_spec(a):
        return pl.BlockSpec((1,) + tuple(a.shape[1:]), lambda l: (l, 0, 0))

    inputs = (x_in, cond, d,
              p['w_in'], p['b_in'],
              p['w_dp_t'], p['b_dp'],
              p['w_cat'], p['b_cat'],
              p['w_out'], p['b_out'],
              p['gamma'], p['beta'],
              p['w_skip'], p['b_skip'], p['w_op'], p['b_op'])
    in_specs = [full_spec(x_in), full_spec(cond), full_spec(d),
                full_spec(p['w_in']), full_spec(p['b_in']),
                layer_spec(p['w_dp_t']), layer_spec(p['b_dp']),
                layer_spec(p['w_cat']), layer_spec(p['b_cat']),
                layer_spec(p['w_out']), layer_spec(p['b_out']),
                layer_spec(p['gamma']), layer_spec(p['beta']),
                full_spec(p['w_skip']), full_spec(p['b_skip']),
                full_spec(p['w_op']), full_spec(p['b_op'])]

    # VMEM budget: resident activations/weights + scratch + per-iteration temporaries.
    def nbytes(a):
        return int(a.size) * a.dtype.itemsize
    resident = sum(nbytes(a) for a in (x_in, cond, d, p['w_in'], p['b_in'],
                                       p['w_skip'], p['b_skip'], p['w_op'], p['b_op']))
    per_layer = sum(nbytes(p[k]) // L for k in
                    ('w_dp_t', 'b_dp', 'w_cat', 'b_cat', 'w_out', 'b_out', 'gamma', 'beta'))
    act = B * C * T * 4
    need = resident + 2 * per_layer + 2 * act + 14 * act + 2 * B * Dout * T * 4
    vmem_limit = int(min(64 * 2 ** 20, max(32 * 2 ** 20, 2 * need)))
    # TODO(synk): for very large T/C the whole-(B,C,T) residency must be replaced by a
    # T-tiled two-pass BatchNorm variant (stats pass + normalize pass) to fit 64 MiB VMEM.

    kern = functools.partial(_wavnet_kernel, cycle=cycle, n_layers=L)
    return pl.pallas_call(
        kern,
        out_shape=jax.ShapeDtypeStruct((B, Dout, T), jnp.float32),
        grid_spec=pltpu.PrefetchScalarGridSpec(
            num_scalar_prefetch=0,
            grid=(L,),
            in_specs=in_specs,
            out_specs=pl.BlockSpec((B, Dout, T), lambda l: (0, 0, 0)),
            scratch_shapes=[pltpu.VMEM((B, C, T), jnp.float32),   # x (carried)
                            pltpu.VMEM((B, C, T), jnp.float32)],  # skip accumulator
        ),
        compiler_params=pltpu.CompilerParams(
            dimension_semantics=("arbitrary",),   # layers are sequential (carried state)
            vmem_limit_bytes=vmem_limit),
    )(*inputs)


# ----------------------------- parameters & forward ----------------------------
def init_params(key, in_dims, out_dims, C, n_layers, cycle):
    def nrm(k, shape, scale=0.1):
        return scale * jax.random.normal(k, shape, dtype=jnp.float32)

    keys = iter(jax.random.split(key, 12 + 8 * n_layers))
    p = {
        'C': C, 'n_layers': n_layers, 'cycle': cycle,
        'w_in': nrm(next(keys), (C, in_dims)),
        'b_in': nrm(next(keys), (C, 1)),
        'w1t': nrm(next(keys), (C, 4 * C)),
        'b1': nrm(next(keys), (1, 4 * C)),
        'w2t': nrm(next(keys), (4 * C, C)),
        'b2': nrm(next(keys), (1, C)),
        'w_skip': nrm(next(keys), (C, C)),
        'b_skip': nrm(next(keys), (C, 1)),
        # output_projection weight is zero-initialized in the module; bias is kept.
        'w_op': jnp.zeros((out_dims, C), jnp.float32),
        'b_op': 0.1 * jnp.ones((out_dims, 1), jnp.float32),
    }
    w_dp, b_dp, w_cat, b_cat, w_out, b_out, gam, bet = [], [], [], [], [], [], [], []
    for _ in range(n_layers):
        w_dp.append(nrm(next(keys), (C, C)))            # stored transposed: (in, out)
        b_dp.append(nrm(next(keys), (1, C)))
        wdil = nrm(next(keys), (2 * C, C, 3))           # Conv1d(C, 2C, 3) weight
        wcond = nrm(next(keys), (2 * C, C))             # Conv1d(C, 2C, 1) weight
        w_cat.append(jnp.concatenate([wdil[:, :, 0], wdil[:, :, 1], wdil[:, :, 2], wcond],
                                     axis=1))           # (2C, 4C)
        b_cat.append(nrm(next(keys), (2 * C, 1)) + nrm(next(keys), (2 * C, 1)))
        w_out.append(nrm(next(keys), (2 * C, C)))
        b_out.append(nrm(next(keys), (2 * C, 1)))
        gam.append(jnp.ones((2 * C, 1), jnp.float32))
        bet.append(jnp.zeros((2 * C, 1), jnp.float32))
    p.update({
        'w_dp_t': jnp.stack(w_dp), 'b_dp': jnp.stack(b_dp),
        'w_cat': jnp.stack(w_cat), 'b_cat': jnp.stack(b_cat),
        'w_out': jnp.stack(w_out), 'b_out': jnp.stack(b_out),
        'gamma': jnp.stack(gam), 'beta': jnp.stack(bet),
    })
    return p


def _sinusoidal_emb(diffusion_step, C, pe_scale):
    half = C // 2
    freqs = jnp.exp(jnp.arange(half, dtype=jnp.float32)
                    * -(math.log(10000.0) / (half - 1)))
    emb = diffusion_step.astype(jnp.float32)[:, None] * freqs[None, :] * pe_scale
    return jnp.concatenate([jnp.sin(emb), jnp.cos(emb)], axis=-1)      # (B, C)


def bn1wavnet_forward(params, x_bct, diffusion_step, cond1_bct, cond2_bct, pe_scale=1.0):
    """x: (B, in_dims, T); diffusion_step: (B,); cond1/cond2: (B, C, T) -> (B, out_dims, T)."""
    C = params['C']
    x = x_bct.astype(jnp.float32)
    cond = (cond1_bct + cond2_bct).astype(jnp.float32)

    # SinusoidalPosEmb is tiny plain-JAX glue; its MLP runs as a Pallas kernel.
    emb = _sinusoidal_emb(diffusion_step, C, pe_scale)
    d = diffusion_mlp(emb, params['w1t'], params['b1'], params['w2t'], params['b2'])

    return fused_wavnet(x, cond, d, params)


# ------------------------------ plain-JAX reference -----------------------------
def reference_forward(params, x_bct, diffusion_step, cond1_bct, cond2_bct, pe_scale=1.0):
    C = params['C']
    L = params['n_layers']
    cycle = params['cycle']
    x = x_bct.astype(jnp.float32)
    cond = (cond1_bct + cond2_bct).astype(jnp.float32)

    xcur = jax.nn.relu(jnp.einsum('oc,bct->bot', params['w_in'], x) + params['b_in'])

    emb = _sinusoidal_emb(diffusion_step, C, pe_scale)
    h = emb @ params['w1t'] + params['b1']
    h = h * jnp.tanh(jax.nn.softplus(h))
    d = h @ params['w2t'] + params['b2']

    T = x.shape[-1]
    skip_sum = jnp.zeros((x.shape[0], C, T), jnp.float32)
    for l in range(L):
        dil = 2 ** (l % cycle)
        dproj = d @ params['w_dp_t'][l] + params['b_dp'][l]
        y = xcur + dproj[:, :, None]
        yp = jnp.pad(y, ((0, 0), (0, 0), (dil, dil)))
        y_m, y_p = yp[:, :, :T], yp[:, :, 2 * dil:]
        cat = jnp.concatenate([y_m, y, y_p, cond], axis=1)
        z = jnp.einsum('ok,bkt->bot', params['w_cat'][l], cat) + params['b_cat'][l]
        gate, filt = z[:, :C], z[:, C:]
        g = jax.nn.sigmoid(gate) * jnp.tanh(filt)
        z2 = jnp.einsum('oc,bct->bot', params['w_out'][l], g) + params['b_out'][l]
        mean = jnp.mean(z2, axis=(0, 2), keepdims=True)
        var = jnp.var(z2, axis=(0, 2), keepdims=True)
        zn = (z2 - mean) * jax.lax.rsqrt(var + 1e-5) * params['gamma'][l] + params['beta'][l]
        resid, skip = zn[:, :C], zn[:, C:]
        xcur = (xcur + resid) / math.sqrt(2.0)
        skip_sum = skip_sum + skip
    s = skip_sum / math.sqrt(L)
    h = jax.nn.relu(jnp.einsum('oc,bct->bot', params['w_skip'], s) + params['b_skip'])
    return jnp.einsum('oc,bct->bot', params['w_op'], h) + params['b_op']


if __name__ == "__main__":
    B, T = 2, 128
    in_dims, out_dims = 4, 4
    C = 32               # residual_channels (== encoder_hidden)
    n_layers, cycle = 4, 2

    key = jax.random.PRNGKey(0)
    k_p, k_x, k_c1, k_c2, k_t, k_w = jax.random.split(key, 6)
    params = init_params(k_p, in_dims, out_dims, C, n_layers, cycle)
    # The module zero-inits output_projection.weight (kept as the init_params default);
    # override with a small non-zero weight here so the numeric check exercises the
    # whole network instead of comparing constants.
    params['w_op'] = 0.1 * jax.random.normal(k_w, (out_dims, C), dtype=jnp.float32)

    x = jax.random.normal(k_x, (B, in_dims, T), dtype=jnp.float32)
    cond1 = jax.random.normal(k_c1, (B, C, T), dtype=jnp.float32)
    cond2 = jax.random.normal(k_c2, (B, C, T), dtype=jnp.float32)
    diffusion_step = jax.random.uniform(k_t, (B,), dtype=jnp.float32,
                                        minval=0.0, maxval=100.0)

    out = bn1wavnet_forward(params, x, diffusion_step, cond1, cond2)
    out = jax.block_until_ready(out)
    assert out.shape == (B, out_dims, T)
    assert bool(jnp.all(jnp.isfinite(out)))

    ref = jax.block_until_ready(reference_forward(params, x, diffusion_step, cond1, cond2))
    err = float(jnp.max(jnp.abs(out - ref)))
    assert err < 5e-3, f"kernel vs reference mismatch: max abs err = {err}"
    print("KERNEL_OK")
</pallas_src>

<mosaic_0001>
module attributes {stable_mosaic.version = 11 : i64} {
  func.func @_mlp_kernel(%arg0: memref<2x32xf32, #tpu.memory_space<vmem>>, %arg1: memref<32x128xf32, #tpu.memory_space<vmem>>, %arg2: memref<1x128xf32, #tpu.memory_space<vmem>>, %arg3: memref<128x32xf32, #tpu.memory_space<vmem>>, %arg4: memref<1x32xf32, #tpu.memory_space<vmem>>, %arg5: memref<2x32xf32, #tpu.memory_space<vmem>>) attributes {dimension_semantics = [], scalar_prefetch = 0 : i64, scratch_operands = 0 : i64, tpu.core_type = #tpu.core_type<tc>} {
    %c0 = arith.constant 0 : index
    %c0_0 = arith.constant 0 : index
    %0 = vector.load %arg0[%c0, %c0_0] : memref<2x32xf32, #tpu.memory_space<vmem>>, vector<2x32xf32>
    %c0_1 = arith.constant 0 : index
    %c0_2 = arith.constant 0 : index
    %1 = vector.load %arg1[%c0_1, %c0_2] : memref<32x128xf32, #tpu.memory_space<vmem>>, vector<32x128xf32>
    %cst = arith.constant dense<0.000000e+00> : vector<2x128xf32>
    %2 = tpu.matmul %0, %1, %cst {dimension_numbers = #tpu.dot_dimension_numbers<[1], [0], [0], [1], [0, 0, 1, 1], [], []>, precision = #tpu.contract_precision<fp32>} : vector<2x32xf32>, vector<32x128xf32>, vector<2x128xf32> -> vector<2x128xf32>
    %c0_3 = arith.constant 0 : index
    %c0_4 = arith.constant 0 : index
    %3 = vector.load %arg2[%c0_3, %c0_4] : memref<1x128xf32, #tpu.memory_space<vmem>>, vector<1x128xf32>
    %4 = vector.broadcast %3 : vector<1x128xf32> to vector<2x128xf32>
    %5 = arith.addf %2, %4 : vector<2x128xf32>
    %cst_5 = arith.constant 2.000000e+01 : f32
    %6 = vector.broadcast %cst_5 : f32 to vector<2x128xf32>
    %7 = arith.cmpf ogt, %5, %6 : vector<2x128xf32>
    %cst_6 = arith.constant 2.000000e+01 : f32
    %8 = vector.broadcast %cst_6 : f32 to vector<2x128xf32>
    %9 = arith.minimumf %5, %8 : vector<2x128xf32>
    %10 = math.exp %9 : vector<2x128xf32>
    %cst_7 = arith.constant 1.000000e+00 : f32
    %11 = vector.broadcast %cst_7 : f32 to vector<2x128xf32>
    %12 = arith.addf %11, %10 : vector<2x128xf32>
    %13 = math.log %12 : vector<2x128xf32>
    %14 = arith.select %7, %5, %13 : vector<2x128xi1>, vector<2x128xf32>
    %15 = math.tanh %14 : vector<2x128xf32>
    %16 = arith.mulf %5, %15 : vector<2x128xf32>
    %c0_8 = arith.constant 0 : index
    %c0_9 = arith.constant 0 : index
    %17 = vector.load %arg3[%c0_8, %c0_9] : memref<128x32xf32, #tpu.memory_space<vmem>>, vector<128x32xf32>
    %cst_10 = arith.constant dense<0.000000e+00> : vector<2x32xf32>
    %18 = tpu.matmul %16, %17, %cst_10 {dimension_numbers = #tpu.dot_dimension_numbers<[1], [0], [0], [1], [0, 0, 1, 1], [], []>, precision = #tpu.contract_precision<fp32>} : vector<2x128xf32>, vector<128x32xf32>, vector<2x32xf32> -> vector<2x32xf32>
    %c0_11 = arith.constant 0 : index
    %c0_12 = arith.constant 0 : index
    %19 = vector.load %arg4[%c0_11, %c0_12] : memref<1x32xf32, #tpu.memory_space<vmem>>, vector<1x32xf32>
    %20 = vector.broadcast %19 : vector<1x32xf32> to vector<2x32xf32>
    %21 = arith.addf %18, %20 : vector<2x32xf32>
    %c0_13 = arith.constant 0 : index
    %c0_14 = arith.constant 0 : index
    %22 = vector.load %arg5[%c0_13, %c0_14] : memref<2x32xf32, #tpu.memory_space<vmem>>, vector<2x32xf32>
    tpu.vector_store %arg5[%c0_13, %c0_14], %21 {strides = array<i32>} : memref<2x32xf32, #tpu.memory_space<vmem>>, vector<2x32xf32>,
    return
  }
}

</mosaic_0001>

<llo_original>
// kernel: tpu_custom_call.1
$region0: #{tpu_custom_call.1}
  #allocation0 [shape = 'u32[]', space=smem, size = 0x4, offset = 0x4, fixed_abs, tag = 'smem constant byte address 0x4 - core index']
  #allocation1 [shape = 'u32[72,128]{1,0:T(1,128)}', space=vmem, size = 0x9000, scoped, tag = 'internal scratch']
  %s0 = inlined_call_operand.vmem [shape: f32[2,32], index: 0, kind: input, shape index: {}]
  %s1 = inlined_call_operand.vmem [shape: f32[32,128], index: 1, kind: input, shape index: {}]
  %s2 = inlined_call_operand.vmem [shape: f32[1,128], index: 2, kind: input, shape index: {}]
  %s3 = inlined_call_operand.vmem [shape: f32[128,32], index: 3, kind: input, shape index: {}]
  %s4 = inlined_call_operand.vmem [shape: f32[1,32], index: 4, kind: input, shape index: {}]
  %s5 = inlined_call_operand.hbm [shape: f32[2,32], index: 5, kind: output, shape index: {}]
  %s6 = sld [smem:[#allocation0]]
  $region30: #{tpu_custom_call.1} parent=0
    _
  %s8 = ssub.s32 1, %s6
  %s9 = scalar_select 0, %s8, %s6
  $region1: #{tpu_custom_call.1} parent=0
    #allocation2 [shape = 'u8[1024]{0}', space=vmem, size = 0x400, scoped, tag = 'output window, operand 0, single buffered']
    #allocation3 [shape = 's32[1]{0}', space=sflag, size = 0x4, scoped, tag = 'scoped memory for tpu_custom_call.1']
    %10 = vsyncpa [#allocation3], 0
    // Predicated region
    $region2: #{tpu_custom_call.1} parent=1 // pred_check
      _
    $region3: #{tpu_custom_call.1} parent=1 // pred_check_branch
      %12 = sbr.rel (0) target = $region5
    $region4: #{tpu_custom_call.1} parent=1 // pred_region
      _
    $region5: #{tpu_custom_call.1} parent=1 // pred_fallthru
      _
    // Predicated region
    $region6: #{tpu_custom_call.1} parent=1 // pred_check
      _
    $region7: #{tpu_custom_call.1} parent=1 // pred_check_branch
      %14 = sbr.rel (0) target = $region9
    $region8: #{tpu_custom_call.1} parent=1 // pred_region
      _
    $region9: #{tpu_custom_call.1} parent=1 // pred_fallthru
      _
    // Predicated region
    $region10: #{tpu_custom_call.1} parent=1 // pred_check
      _
    $region11: #{tpu_custom_call.1} parent=1 // pred_check_branch
      %16 = sbr.rel (0) target = $region13
    $region12: #{tpu_custom_call.1} parent=1 // pred_region
      _
    $region13: #{tpu_custom_call.1} parent=1 // pred_fallthru
      _
    // Predicated region
    $region14: #{tpu_custom_call.1} parent=1 // pred_check
      _
    $region15: #{tpu_custom_call.1} parent=1 // pred_check_branch
      %18 = sbr.rel (0) target = $region17
    $region16: #{tpu_custom_call.1} parent=1 // pred_region
      _
    $region17: #{tpu_custom_call.1} parent=1 // pred_fallthru
      _
    // Predicated region
    $region18: #{tpu_custom_call.1} parent=1 // pred_check
      _
    $region19: #{tpu_custom_call.1} parent=1 // pred_check_branch
      %20 = sbr.rel (0) target = $region21
    $region20: #{tpu_custom_call.1} parent=1 // pred_region
      _
    $region21: #{tpu_custom_call.1} parent=1 // pred_fallthru
      _
    %v21 = vld [vmem:[%s0] sm:$0x3]
    %v22 = vld [vmem:[%s1] sm:$0xff]
    %v23 = vld [vmem:[%s1 + $0x8] sm:$0xff]
    %v24 = vld [vmem:[%s1 + $0x10] sm:$0xff]
    %v25 = vld [vmem:[%s1 + $0x18] sm:$0xff]
    %v26 = vld [vmem:[%s2] sm:$0x1]
    %v28 = vperm.slane %v26, 0
    %vm30 = vcmask 261120
    %v32 = vsel %vm30, %v21, 0
    %34 = vmatpush.msra.mxu0 0.0
    %35 = vmatpush.msra.mxu0 0.0
    %36 = vmatpush.msra.mxu0 0.0
    %37 = vmatpush.msra.mxu0 0.0
    %38 = vmatpush.msra.mxu0 0.0
    %39 = vmatpush.msra.mxu0 0.0
    %40 = vmatpush.msra.mxu0 0.0
    %41 = vmatpush.msra.mxu0 0.0
    %42 = vmatpush.msra.mxu0 0.0
    %43 = vmatpush.msra.mxu0 0.0
    %44 = vmatpush.msra.mxu0 0.0
    %45 = vmatpush.msra.mxu0 0.0
    %v46 = vand.u32 %v25, 4294901760
    %47 = vmatpush.msra.mxu0 %v46
    %v48 = vand.u32 %v24, 4294901760
    %49 = vmatpush.msra.mxu0 %v48
    %v50 = vand.u32 %v23, 4294901760
    %51 = vmatpush.msra.mxu0 %v50
    %v52 = vand.u32 %v22, 4294901760
    %53 = vmatpush.msra.mxu0 %v52
    %v54 = vand.u32 %v32, 4294901760
    %v55 = vsub.f32 %v32, %v54
    %v56 = vand.u32 %v55, 4294901760
    %v57 = vsub.f32 %v55, %v56
    %v58 = vand.u32 %v57, 4294901760
    %59 = vmatmul.f32.gmra.mxu0 %v58
    %v60 = vpop.f32.mrf.mxu0
    %v61 = vadd.f32 %v28, %v60
    %62 = vdwg.mxu0
    %63 = vmatpush.msra.mxu0 0.0
    %64 = vmatpush.msra.mxu0 0.0
    %65 = vmatpush.msra.mxu0 0.0
    %66 = vmatpush.msra.mxu0 0.0
    %67 = vmatpush.msra.mxu0 0.0
    %68 = vmatpush.msra.mxu0 0.0
    %69 = vmatpush.msra.mxu0 0.0
    %70 = vmatpush.msra.mxu0 0.0
    %71 = vmatpush.msra.mxu0 0.0
    %72 = vmatpush.msra.mxu0 0.0
    %73 = vmatpush.msra.mxu0 0.0
    %74 = vmatpush.msra.mxu0 0.0
    %v75 = vand.u32 %v25, 4294901760
    %v76 = vsub.f32 %v25, %v75
    %v77 = vand.u32 %v76, 4294901760
    %v78 = vsub.f32 %v76, %v77
    %v79 = vand.u32 %v78, 4294901760
    %80 = vmatpush.msra.mxu0 %v79
    %v81 = vand.u32 %v24, 4294901760
    %v82 = vsub.f32 %v24, %v81
    %v83 = vand.u32 %v82, 4294901760
    %v84 = vsub.f32 %v82, %v83
    %v85 = vand.u32 %v84, 4294901760
    %86 = vmatpush.msra.mxu0 %v85
    %v87 = vand.u32 %v23, 4294901760
    %v88 = vsub.f32 %v23, %v87
    %v89 = vand.u32 %v88, 4294901760
    %v90 = vsub.f32 %v88, %v89
    %v91 = vand.u32 %v90, 4294901760
    %92 = vmatpush.msra.mxu0 %v91
    %v93 = vand.u32 %v22, 4294901760
    %v94 = vsub.f32 %v22, %v93
    %v95 = vand.u32 %v94, 4294901760
    %v96 = vsub.f32 %v94, %v95
    %v97 = vand.u32 %v96, 4294901760
    %98 = vmatpush.msra.mxu0 %v97
    %v99 = vand.u32 %v32, 4294901760
    %100 = vmatmul.f32.gmra.mxu0 %v99
    %v101 = vpop.f32.mrf.mxu0
    %v102 = vadd.f32 %v61, %v101
    %103 = vdwg.mxu0
    %104 = vmatpush.msra.mxu0 0.0
    %105 = vmatpush.msra.mxu0 0.0
    %106 = vmatpush.msra.mxu0 0.0
    %107 = vmatpush.msra.mxu0 0.0
    %108 = vmatpush.msra.mxu0 0.0
    %109 = vmatpush.msra.mxu0 0.0
    %110 = vmatpush.msra.mxu0 0.0
    %111 = vmatpush.msra.mxu0 0.0
    %112 = vmatpush.msra.mxu0 0.0
    %113 = vmatpush.msra.mxu0 0.0
    %114 = vmatpush.msra.mxu0 0.0
    %115 = vmatpush.msra.mxu0 0.0
    %v116 = vand.u32 %v25, 4294901760
    %v117 = vsub.f32 %v25, %v116
    %118 = vmatpush.msra.mxu0 %v117
    %v119 = vand.u32 %v24, 4294901760
    %v120 = vsub.f32 %v24, %v119
    %121 = vmatpush.msra.mxu0 %v120
    %v122 = vand.u32 %v23, 4294901760
    %v123 = vsub.f32 %v23, %v122
    %124 = vmatpush.msra.mxu0 %v123
    %v125 = vand.u32 %v22, 4294901760
    %v126 = vsub.f32 %v22, %v125
    %127 = vmatpush.msra.mxu0 %v126
    %v128 = vand.u32 %v32, 4294901760
    %v129 = vsub.f32 %v32, %v128
    %130 = vmatmul.f32.gmra.mxu0 %v129
    %v131 = vpop.f32.mrf.mxu0
    %v132 = vadd.f32 %v102, %v131
    %133 = vdwg.mxu0
    %134 = vmatpush.msra.mxu0 0.0
    %135 = vmatpush.msra.mxu0 0.0
    %136 = vmatpush.msra.mxu0 0.0
    %137 = vmatpush.msra.mxu0 0.0
    %138 = vmatpush.msra.mxu0 0.0
    %139 = vmatpush.msra.mxu0 0.0
    %140 = vmatpush.msra.mxu0 0.0
    %141 = vmatpush.msra.mxu0 0.0
    %142 = vmatpush.msra.mxu0 0.0
    %143 = vmatpush.msra.mxu0 0.0
    %144 = vmatpush.msra.mxu0 0.0
    %145 = vmatpush.msra.mxu0 0.0
    %v146 = vand.u32 %v25, 4294901760
    %147 = vmatpush.msra.mxu0 %v146
    %v148 = vand.u32 %v24, 4294901760
    %149 = vmatpush.msra.mxu0 %v148
    %v150 = vand.u32 %v23, 4294901760
    %151 = vmatpush.msra.mxu0 %v150
    %v152 = vand.u32 %v22, 4294901760
    %153 = vmatpush.msra.mxu0 %v152
    %v154 = vand.u32 %v32, 4294901760
    %v155 = vsub.f32 %v32, %v154
    %v156 = vand.u32 %v155, 4294901760
    %157 = vmatmul.f32.gmra.mxu0 %v156
    %v158 = vpop.f32.mrf.mxu0
    %v159 = vadd.f32 %v132, %v158
    %160 = vdwg.mxu0
    %161 = vmatpush.msra.mxu0 0.0
    %162 = vmatpush.msra.mxu0 0.0
    %163 = vmatpush.msra.mxu0 0.0
    %164 = vmatpush.msra.mxu0 0.0
    %165 = vmatpush.msra.mxu0 0.0
    %166 = vmatpush.msra.mxu0 0.0
    %167 = vmatpush.msra.mxu0 0.0
    %168 = vmatpush.msra.mxu0 0.0
    %169 = vmatpush.msra.mxu0 0.0
    %170 = vmatpush.msra.mxu0 0.0
    %171 = vmatpush.msra.mxu0 0.0
    %172 = vmatpush.msra.mxu0 0.0
    %v173 = vand.u32 %v25, 4294901760
    %v174 = vsub.f32 %v25, %v173
    %v175 = vand.u32 %v174, 4294901760
    %176 = vmatpush.msra.mxu0 %v175
    %v177 = vand.u32 %v24, 4294901760
    %v178 = vsub.f32 %v24, %v177
    %v179 = vand.u32 %v178, 4294901760
    %180 = vmatpush.msra.mxu0 %v179
    %v181 = vand.u32 %v23, 4294901760
    %v182 = vsub.f32 %v23, %v181
    %v183 = vand.u32 %v182, 4294901760
    %184 = vmatpush.msra.mxu0 %v183
    %v185 = vand.u32 %v22, 4294901760
    %v186 = vsub.f32 %v22, %v185
    %v187 = vand.u32 %v186, 4294901760
    %188 = vmatpush.msra.mxu0 %v187
    %v189 = vand.u32 %v32, 4294901760
    %190 = vmatmul.f32.gmra.mxu0 %v189
    %v191 = vpop.f32.mrf.mxu0
    %v192 = vadd.f32 %v159, %v191
    %193 = vdwg.mxu0
    %194 = vmatpush.msra.mxu0 0.0
    %195 = vmatpush.msra.mxu0 0.0
    %196 = vmatpush.msra.mxu0 0.0
    %197 = vmatpush.msra.mxu0 0.0
    %198 = vmatpush.msra.mxu0 0.0
    %199 = vmatpush.msra.mxu0 0.0
    %200 = vmatpush.msra.mxu0 0.0
    %201 = vmatpush.msra.mxu0 0.0
    %202 = vmatpush.msra.mxu0 0.0
    %203 = vmatpush.msra.mxu0 0.0
    %204 = vmatpush.msra.mxu0 0.0
    %205 = vmatpush.msra.mxu0 0.0
    %v206 = vand.u32 %v25, 4294901760
    %207 = vmatpush.msra.mxu0 %v206
    %v208 = vand.u32 %v24, 4294901760
    %209 = vmatpush.msra.mxu0 %v208
    %v210 = vand.u32 %v23, 4294901760
    %211 = vmatpush.msra.mxu0 %v210
    %v212 = vand.u32 %v22, 4294901760
    %213 = vmatpush.msra.mxu0 %v212
    %v214 = vand.u32 %v32, 4294901760
    %215 = vmatmul.f32.gmra.mxu0 %v214
    %v216 = vpop.f32.mrf.mxu0
    %v217 = vadd.f32 %v192, %v216
    %218 = vdwg.mxu0
    %vm219 = vcmp.gt.f32.partialorder %v217, 20.0
    %v220 = vmin.f32 %v217, 20.0
    %v221 = vmul.f32 %v220, 1.442695
    %v222 = vpow.pop %v221
    %v223 = vadd.f32 %v222, 1.0
    %v224 = vlog2.pop %v223
    %v225 = vmul.f32 %v224, 0.6931472
    %v226 = vsel %vm219, %v217, %v225
    %v227 = vtanh.pop %v226
    %v228 = vmul.f32 %v217, %v227
    %v229 = vld [vmem:[%s3] sm:$0xff]
    %v230 = vld [vmem:[%s3 + $0x8] sm:$0xff]
    %v231 = vld [vmem:[%s3 + $0x10] sm:$0xff]
    %v232 = vld [vmem:[%s3 + $0x18] sm:$0xff]
    %v233 = vld [vmem:[%s3 + $0x20] sm:$0xff]
    %v234 = vld [vmem:[%s3 + $0x28] sm:$0xff]
    %v235 = vld [vmem:[%s3 + $0x30] sm:$0xff]
    %v236 = vld [vmem:[%s3 + $0x38] sm:$0xff]
    %v237 = vld [vmem:[%s3 + $0x40] sm:$0xff]
    %v238 = vld [vmem:[%s3 + $0x48] sm:$0xff]
    %v239 = vld [vmem:[%s3 + $0x50] sm:$0xff]
    %v240 = vld [vmem:[%s3 + $0x58] sm:$0xff]
    %v241 = vld [vmem:[%s3 + $0x60] sm:$0xff]
    %v242 = vld [vmem:[%s3 + $0x68] sm:$0xff]
    %v243 = vld [vmem:[%s3 + $0x70] sm:$0xff]
    %v244 = vld [vmem:[%s3 + $0x78] sm:$0xff]
    %v245 = vld [vmem:[%s4] sm:$0x1]
    %v247 = vperm.slane %v245, 0
    %v249 = vand.u32 %v244, 4294901760
    %250 = vmatpush.msra.mxu0 %v249
    %v251 = vand.u32 %v243, 4294901760
    %252 = vmatpush.msra.mxu0 %v251
    %v253 = vand.u32 %v242, 4294901760
    %254 = vmatpush.msra.mxu0 %v253
    %v255 = vand.u32 %v241, 4294901760
    %256 = vmatpush.msra.mxu0 %v255
    %v257 = vand.u32 %v240, 4294901760
    %258 = vmatpush.msra.mxu0 %v257
    %v259 = vand.u32 %v239, 4294901760
    %260 = vmatpush.msra.mxu0 %v259
    %v261 = vand.u32 %v238, 4294901760
    %262 = vmatpush.msra.mxu0 %v261
    %v263 = vand.u32 %v237, 4294901760
    %264 = vmatpush.msra.mxu0 %v263
    %v265 = vand.u32 %v236, 4294901760
    %266 = vmatpush.msra.mxu0 %v265
    %v267 = vand.u32 %v235, 4294901760
    %268 = vmatpush.msra.mxu0 %v267
    %v269 = vand.u32 %v234, 4294901760
    %270 = vmatpush.msra.mxu0 %v269
    %v271 = vand.u32 %v233, 4294901760
    %272 = vmatpush.msra.mxu0 %v271
    %v273 = vand.u32 %v232, 4294901760
    %274 = vmatpush.msra.mxu0 %v273
    %v275 = vand.u32 %v231, 4294901760
    %276 = vmatpush.msra.mxu0 %v275
    %v277 = vand.u32 %v230, 4294901760
    %278 = vmatpush.msra.mxu0 %v277
    %v279 = vand.u32 %v229, 4294901760
    %280 = vmatpush.msra.mxu0 %v279
    %v281 = vand.u32 %v228, 4294901760
    %v282 = vsub.f32 %v228, %v281
    %v283 = vand.u32 %v282, 4294901760
    %v284 = vsub.f32 %v282, %v283
    %v285 = vand.u32 %v284, 4294901760
    %286 = vmatmul.f32.gmra.mxu0 %v285
    %v287 = vpop.f32.mrf.mxu0
    %v288 = vadd.f32 %v247, %v287
    %289 = vdwg.mxu0
    %v290 = vand.u32 %v244, 4294901760
    %v291 = vsub.f32 %v244, %v290
    %v292 = vand.u32 %v291, 4294901760
    %v293 = vsub.f32 %v291, %v292
    %v294 = vand.u32 %v293, 4294901760
    %295 = vmatpush.msra.mxu0 %v294
    %v296 = vand.u32 %v243, 4294901760
    %v297 = vsub.f32 %v243, %v296
    %v298 = vand.u32 %v297, 4294901760
    %v299 = vsub.f32 %v297, %v298
    %v300 = vand.u32 %v299, 4294901760
    %301 = vmatpush.msra.mxu0 %v300
    %v302 = vand.u32 %v242, 4294901760
    %v303 = vsub.f32 %v242, %v302
    %v304 = vand.u32 %v303, 4294901760
    %v305 = vsub.f32 %v303, %v304
    %v306 = vand.u32 %v305, 4294901760
    %307 = vmatpush.msra.mxu0 %v306
    %v308 = vand.u32 %v241, 4294901760
    %v309 = vsub.f32 %v241, %v308
    %v310 = vand.u32 %v309, 4294901760
    %v311 = vsub.f32 %v309, %v310
    %v312 = vand.u32 %v311, 4294901760
    %313 = vmatpush.msra.mxu0 %v312
    %v314 = vand.u32 %v240, 4294901760
    %v315 = vsub.f32 %v240, %v314
    %v316 = vand.u32 %v315, 4294901760
    %v317 = vsub.f32 %v315, %v316
    %v318 = vand.u32 %v317, 4294901760
    %319 = vmatpush.msra.mxu0 %v318
    %v320 = vand.u32 %v239, 4294901760
    %v321 = vsub.f32 %v239, %v320
    %v322 = vand.u32 %v321, 4294901760
    %v323 = vsub.f32 %v321, %v322
    %v324 = vand.u32 %v323, 4294901760
    %325 = vmatpush.msra.mxu0 %v324
    %v326 = vand.u32 %v238, 4294901760
    %v327 = vsub.f32 %v238, %v326
    %v328 = vand.u32 %v327, 4294901760
    %v329 = vsub.f32 %v327, %v328
    %v330 = vand.u32 %v329, 4294901760
    %331 = vmatpush.msra.mxu0 %v330
    %v332 = vand.u32 %v237, 4294901760
    %v333 = vsub.f32 %v237, %v332
    %v334 = vand.u32 %v333, 4294901760
    %v335 = vsub.f32 %v333, %v334
    %v336 = vand.u32 %v335, 4294901760
    %337 = vmatpush.msra.mxu0 %v336
    %v338 = vand.u32 %v236, 4294901760
    %v339 = vsub.f32 %v236, %v338
    %v340 = vand.u32 %v339, 4294901760
    %v341 = vsub.f32 %v339, %v340
    %v342 = vand.u32 %v341, 4294901760
    %343 = vmatpush.msra.mxu0 %v342
    %v344 = vand.u32 %v235, 4294901760
    %v345 = vsub.f32 %v235, %v344
    %v346 = vand.u32 %v345, 4294901760
    %v347 = vsub.f32 %v345, %v346
    %v348 = vand.u32 %v347, 4294901760
    %349 = vmatpush.msra.mxu0 %v348
    %v350 = vand.u32 %v234, 4294901760
    %v351 = vsub.f32 %v234, %v350
    %v352 = vand.u32 %v351, 4294901760
    %v353 = vsub.f32 %v351, %v352
    %v354 = vand.u32 %v353, 4294901760
    %355 = vmatpush.msra.mxu0 %v354
    %v356 = vand.u32 %v233, 4294901760
    %v357 = vsub.f32 %v233, %v356
    %v358 = vand.u32 %v357, 4294901760
    %v359 = vsub.f32 %v357, %v358
    %v360 = vand.u32 %v359, 4294901760
    %361 = vmatpush.msra.mxu0 %v360
    %v362 = vand.u32 %v232, 4294901760
    %v363 = vsub.f32 %v232, %v362
    %v364 = vand.u32 %v363, 4294901760
    %v365 = vsub.f32 %v363, %v364
    %v366 = vand.u32 %v365, 4294901760
    %367 = vmatpush.msra.mxu0 %v366
    %v368 = vand.u32 %v231, 4294901760
    %v369 = vsub.f32 %v231, %v368
    %v370 = vand.u32 %v369, 4294901760
    %v371 = vsub.f32 %v369, %v370
    %v372 = vand.u32 %v371, 4294901760
    %373 = vmatpush.msra.mxu0 %v372
    %v374 = vand.u32 %v230, 4294901760
    %v375 = vsub.f32 %v230, %v374
    %v376 = vand.u32 %v375, 4294901760
    %v377 = vsub.f32 %v375, %v376
    %v378 = vand.u32 %v377, 4294901760
    %379 = vmatpush.msra.mxu0 %v378
    %v380 = vand.u32 %v229, 4294901760
    %v381 = vsub.f32 %v229, %v380
    %v382 = vand.u32 %v381, 4294901760
    %v383 = vsub.f32 %v381, %v382
    %v384 = vand.u32 %v383, 4294901760
    %385 = vmatpush.msra.mxu0 %v384
    %v386 = vand.u32 %v228, 4294901760
    %387 = vmatmul.f32.gmra.mxu0 %v386
    %v388 = vpop.f32.mrf.mxu0
    %v389 = vadd.f32 %v288, %v388
    %390 = vdwg.mxu0
    %v391 = vand.u32 %v244, 4294901760
    %v392 = vsub.f32 %v244, %v391
    %393 = vmatpush.msra.mxu0 %v392
    %v394 = vand.u32 %v243, 4294901760
    %v395 = vsub.f32 %v243, %v394
    %396 = vmatpush.msra.mxu0 %v395
    %v397 = vand.u32 %v242, 4294901760
    %v398 = vsub.f32 %v242, %v397
    %399 = vmatpush.msra.mxu0 %v398
    %v400 = vand.u32 %v241, 4294901760
    %v401 = vsub.f32 %v241, %v400
    %402 = vmatpush.msra.mxu0 %v401
    %v403 = vand.u32 %v240, 4294901760
    %v404 = vsub.f32 %v240, %v403
    %405 = vmatpush.msra.mxu0 %v404
    %v406 = vand.u32 %v239, 4294901760
    %v407 = vsub.f32 %v239, %v406
    %408 = vmatpush.msra.mxu0 %v407
    %v409 = vand.u32 %v238, 4294901760
    %v410 = vsub.f32 %v238, %v409
    %411 = vmatpush.msra.mxu0 %v410
    %v412 = vand.u32 %v237, 4294901760
    %v413 = vsub.f32 %v237, %v412
    %414 = vmatpush.msra.mxu0 %v413
    %v415 = vand.u32 %v236, 4294901760
    %v416 = vsub.f32 %v236, %v415
    %417 = vmatpush.msra.mxu0 %v416
    %v418 = vand.u32 %v235, 4294901760
    %v419 = vsub.f32 %v235, %v418
    %420 = vmatpush.msra.mxu0 %v419
    %v421 = vand.u32 %v234, 4294901760
    %v422 = vsub.f32 %v234, %v421
    %423 = vmatpush.msra.mxu0 %v422
    %v424 = vand.u32 %v233, 4294901760
    %v425 = vsub.f32 %v233, %v424
    %426 = vmatpush.msra.mxu0 %v425
    %v427 = vand.u32 %v232, 4294901760
    %v428 = vsub.f32 %v232, %v427
    %429 = vmatpush.msra.mxu0 %v428
    %v430 = vand.u32 %v231, 4294901760
    %v431 = vsub.f32 %v231, %v430
    %432 = vmatpush.msra.mxu0 %v431
    %v433 = vand.u32 %v230, 4294901760
    %v434 = vsub.f32 %v230, %v433
    %435 = vmatpush.msra.mxu0 %v434
    %v436 = vand.u32 %v229, 4294901760
    %v437 = vsub.f32 %v229, %v436
    %438 = vmatpush.msra.mxu0 %v437
    %v439 = vand.u32 %v228, 4294901760
    %v440 = vsub.f32 %v228, %v439
    %441 = vmatmul.f32.gmra.mxu0 %v440
    %v442 = vpop.f32.mrf.mxu0
    %v443 = vadd.f32 %v389, %v442
    %444 = vdwg.mxu0
    %v445 = vand.u32 %v244, 4294901760
    %446 = vmatpush.msra.mxu0 %v445
    %v447 = vand.u32 %v243, 4294901760
    %448 = vmatpush.msra.mxu0 %v447
    %v449 = vand.u32 %v242, 4294901760
    %450 = vmatpush.msra.mxu0 %v449
    %v451 = vand.u32 %v241, 4294901760
    %452 = vmatpush.msra.mxu0 %v451
    %v453 = vand.u32 %v240, 4294901760
    %454 = vmatpush.msra.mxu0 %v453
    %v455 = vand.u32 %v239, 4294901760
    %456 = vmatpush.msra.mxu0 %v455
    %v457 = vand.u32 %v238, 4294901760
    %458 = vmatpush.msra.mxu0 %v457
    %v459 = vand.u32 %v237, 4294901760
    %460 = vmatpush.msra.mxu0 %v459
    %v461 = vand.u32 %v236, 4294901760
    %462 = vmatpush.msra.mxu0 %v461
    %v463 = vand.u32 %v235, 4294901760
    %464 = vmatpush.msra.mxu0 %v463
    %v465 = vand.u32 %v234, 4294901760
    %466 = vmatpush.msra.mxu0 %v465
    %v467 = vand.u32 %v233, 4294901760
    %468 = vmatpush.msra.mxu0 %v467
    %v469 = vand.u32 %v232, 4294901760
    %470 = vmatpush.msra.mxu0 %v469
    %v471 = vand.u32 %v231, 4294901760
    %472 = vmatpush.msra.mxu0 %v471
    %v473 = vand.u32 %v230, 4294901760
    %474 = vmatpush.msra.mxu0 %v473
    %v475 = vand.u32 %v229, 4294901760
    %476 = vmatpush.msra.mxu0 %v475
    %v477 = vand.u32 %v228, 4294901760
    %v478 = vsub.f32 %v228, %v477
    %v479 = vand.u32 %v478, 4294901760
    %480 = vmatmul.f32.gmra.mxu0 %v479
    %v481 = vpop.f32.mrf.mxu0
    %v482 = vadd.f32 %v443, %v481
    %483 = vdwg.mxu0
    %v484 = vand.u32 %v244, 4294901760
    %v485 = vsub.f32 %v244, %v484
    %v486 = vand.u32 %v485, 4294901760
    %487 = vmatpush.msra.mxu0 %v486
    %v488 = vand.u32 %v243, 4294901760
    %v489 = vsub.f32 %v243, %v488
    %v490 = vand.u32 %v489, 4294901760
    %491 = vmatpush.msra.mxu0 %v490
    %v492 = vand.u32 %v242, 4294901760
    %v493 = vsub.f32 %v242, %v492
    %v494 = vand.u32 %v493, 4294901760
    %495 = vmatpush.msra.mxu0 %v494
    %v496 = vand.u32 %v241, 4294901760
    %v497 = vsub.f32 %v241, %v496
    %v498 = vand.u32 %v497, 4294901760
    %499 = vmatpush.msra.mxu0 %v498
    %v500 = vand.u32 %v240, 4294901760
    %v501 = vsub.f32 %v240, %v500
    %v502 = vand.u32 %v501, 4294901760
    %503 = vmatpush.msra.mxu0 %v502
    %v504 = vand.u32 %v239, 4294901760
    %v505 = vsub.f32 %v239, %v504
    %v506 = vand.u32 %v505, 4294901760
    %507 = vmatpush.msra.mxu0 %v506
    %v508 = vand.u32 %v238, 4294901760
    %v509 = vsub.f32 %v238, %v508
    %v510 = vand.u32 %v509, 4294901760
    %511 = vmatpush.msra.mxu0 %v510
    %v512 = vand.u32 %v237, 4294901760
    %v513 = vsub.f32 %v237, %v512
    %v514 = vand.u32 %v513, 4294901760
    %515 = vmatpush.msra.mxu0 %v514
    %v516 = vand.u32 %v236, 4294901760
    %v517 = vsub.f32 %v236, %v516
    %v518 = vand.u32 %v517, 4294901760
    %519 = vmatpush.msra.mxu0 %v518
    %v520 = vand.u32 %v235, 4294901760
    %v521 = vsub.f32 %v235, %v520
    %v522 = vand.u32 %v521, 4294901760
    %523 = vmatpush.msra.mxu0 %v522
    %v524 = vand.u32 %v234, 4294901760
    %v525 = vsub.f32 %v234, %v524
    %v526 = vand.u32 %v525, 4294901760
    %527 = vmatpush.msra.mxu0 %v526
    %v528 = vand.u32 %v233, 4294901760
    %v529 = vsub.f32 %v233, %v528
    %v530 = vand.u32 %v529, 4294901760
    %531 = vmatpush.msra.mxu0 %v530
    %v532 = vand.u32 %v232, 4294901760
    %v533 = vsub.f32 %v232, %v532
    %v534 = vand.u32 %v533, 4294901760
    %535 = vmatpush.msra.mxu0 %v534
    %v536 = vand.u32 %v231, 4294901760
    %v537 = vsub.f32 %v231, %v536
    %v538 = vand.u32 %v537, 4294901760
    %539 = vmatpush.msra.mxu0 %v538
    %v540 = vand.u32 %v230, 4294901760
    %v541 = vsub.f32 %v230, %v540
    %v542 = vand.u32 %v541, 4294901760
    %543 = vmatpush.msra.mxu0 %v542
    %v544 = vand.u32 %v229, 4294901760
    %v545 = vsub.f32 %v229, %v544
    %v546 = vand.u32 %v545, 4294901760
    %547 = vmatpush.msra.mxu0 %v546
    %v548 = vand.u32 %v228, 4294901760
    %549 = vmatmul.f32.gmra.mxu0 %v548
    %v550 = vpop.f32.mrf.mxu0
    %v551 = vadd.f32 %v482, %v550
    %552 = vdwg.mxu0
    %v553 = vand.u32 %v244, 4294901760
    %554 = vmatpush.msra.mxu0 %v553
    %v555 = vand.u32 %v243, 4294901760
    %556 = vmatpush.msra.mxu0 %v555
    %v557 = vand.u32 %v242, 4294901760
    %558 = vmatpush.msra.mxu0 %v557
    %v559 = vand.u32 %v241, 4294901760
    %560 = vmatpush.msra.mxu0 %v559
    %v561 = vand.u32 %v240, 4294901760
    %562 = vmatpush.msra.mxu0 %v561
    %v563 = vand.u32 %v239, 4294901760
    %564 = vmatpush.msra.mxu0 %v563
    %v565 = vand.u32 %v238, 4294901760
    %566 = vmatpush.msra.mxu0 %v565
    %v567 = vand.u32 %v237, 4294901760
    %568 = vmatpush.msra.mxu0 %v567
    %v569 = vand.u32 %v236, 4294901760
    %570 = vmatpush.msra.mxu0 %v569
    %v571 = vand.u32 %v235, 4294901760
    %572 = vmatpush.msra.mxu0 %v571
    %v573 = vand.u32 %v234, 4294901760
    %574 = vmatpush.msra.mxu0 %v573
    %v575 = vand.u32 %v233, 4294901760
    %576 = vmatpush.msra.mxu0 %v575
    %v577 = vand.u32 %v232, 4294901760
    %578 = vmatpush.msra.mxu0 %v577
    %v579 = vand.u32 %v231, 4294901760
    %580 = vmatpush.msra.mxu0 %v579
    %v581 = vand.u32 %v230, 4294901760
    %582 = vmatpush.msra.mxu0 %v581
    %v583 = vand.u32 %v229, 4294901760
    %584 = vmatpush.msra.mxu0 %v583
    %v585 = vand.u32 %v228, 4294901760
    %586 = vmatmul.f32.gmra.mxu0 %v585
    %v587 = vpop.f32.mrf.mxu0
    %v588 = vadd.f32 %v551, %v587
    %589 = vdwg.mxu0
    %vm590 = vcmask 254976
    %591 = vst.msk [vmem:[#allocation2] sm:$0x3] %vm590, %v588
    // Predicated region
    $region22: #{tpu_custom_call.1} parent=1 // pred_check
      _
    $region23: #{tpu_custom_call.1} parent=1 // pred_check_branch
      %593 = sbr.rel (0) target = $region25
    $region24: #{tpu_custom_call.1} parent=1 // pred_region
      %595 = vsyncadd [#allocation3], 0
      %s597 = sshll.u32 [#allocation2], 4
      %s598 = int_to_ptr.vmem [resolvable:$true] %s597
      %s599 = sshll.u32 %s5, 4
      %s600 = int_to_ptr.hbm [resolvable:$true] %s599
      %602 = dma.vmem_to_hbm [thread:$0]  %s598, 32, %s600, [#allocation3]
    $region25: #{tpu_custom_call.1} parent=1 // pred_fallthru
      _
    // Predicated region
    $region26: #{tpu_custom_call.1} parent=1 // pred_check
      _
    $region27: #{tpu_custom_call.1} parent=1 // pred_check_branch
      %604 = sbr.rel (0) target = $region29
    $region28: #{tpu_custom_call.1} parent=1 // pred_region
      %606 = dma.done [#allocation3], 32
    $region29: #{tpu_custom_call.1} parent=1 // pred_fallthru
      _
    %607 = vsyncpa [#allocation3], 1

</llo_original>
